<compile_context>
chip_gen: v6e
topology: v6e:2x2x1
jax: 0.10.0
libtpu: 0.0.40
codegen_flags: <defaults>
</compile_context>

<pallas_src>
import jax
import jax.numpy as jnp
from jax.experimental import pallas as pl
from jax.experimental.pallas import tpu as pltpu

EMBED_SIZE = 96
HIDDEN_SIZE = 4 * EMBED_SIZE   # 384
LANE = 128                     # pad embed 96 -> 128 for lane-dense layout


def _round_up(x, m):
    return (x + m - 1) // m * m


def _ffn_kernel(x_ref, w1_ref, w2_ref, o_ref):
    # x_ref: (tm, 128) bf16, w1_ref: (128, 384) bf16, w2_ref: (384, 128) bf16,
    # o_ref: (tm, 128) f32
    h = jnp.dot(x_ref[...], w1_ref[...], preferred_element_type=jnp.float32)
    h = jnp.maximum(h, 0.0)  # ReLU on the f32 accumulator
    out = jnp.dot(h.astype(w2_ref.dtype), w2_ref[...],
                  preferred_element_type=jnp.float32)
    o_ref[...] = out.astype(o_ref.dtype)


def feed_forward(x, w1, w2, *, tm=None):
    """x: (B, T, E) float32; w1: (E, 4E); w2: (4E, E)  (transposed vs torch Linear).

    Returns (B, T, E) float32 == Dropout(p=0)(relu(x @ w1) @ w2).
    Matmuls run in bf16 (f32 accumulation); embed dim is zero-padded to 128.
    """
    B, T, E = x.shape
    H = w1.shape[1]
    assert E == EMBED_SIZE and w1.shape == (E, H) and w2.shape == (H, E)

    M = B * T
    Ep = _round_up(E, LANE)  # 128

    # Row-tile: big enough to pipeline DMA vs compute and amortize per-step
    # overhead, small enough to stay well inside v7x's 64 MiB VMEM, and at
    # least 2 blocks (when M allows) so the M axis can shard across TensorCores.
    if tm is None:
        if M >= 1024:
            tm = 512
        else:
            tm = max(8, _round_up(pl.cdiv(M, 2), 8))
    Mp = _round_up(M, tm)
    grid = Mp // tm

    # Zero-pad (padded K lanes / tail rows contribute exactly 0) then cast bf16.
    x2d = jnp.pad(x.reshape(M, E), ((0, Mp - M), (0, Ep - E))).astype(jnp.bfloat16)
    w1p = jnp.pad(w1, ((0, Ep - E), (0, 0))).astype(jnp.bfloat16)   # (128, 384)
    w2p = jnp.pad(w2, ((0, 0), (0, Ep - E))).astype(jnp.bfloat16)   # (384, 128)

    out2d = pl.pallas_call(
        _ffn_kernel,
        out_shape=jax.ShapeDtypeStruct((Mp, Ep), jnp.float32),
        grid_spec=pltpu.PrefetchScalarGridSpec(
            num_scalar_prefetch=0,
            grid=(grid,),
            in_specs=[
                pl.BlockSpec((tm, Ep), lambda i: (i, 0)),   # x row-tile (pipelined)
                pl.BlockSpec((Ep, H), lambda i: (0, 0)),    # w1 (grid-invariant, resident)
                pl.BlockSpec((H, Ep), lambda i: (0, 0)),    # w2 (grid-invariant, resident)
            ],
            out_specs=pl.BlockSpec((tm, Ep), lambda i: (i, 0)),
        ),
        compiler_params=pltpu.CompilerParams(
            dimension_semantics=("parallel",),      # megacore sharding over M blocks
            vmem_limit_bytes=32 * 1024 * 1024,      # safe headroom on v5e/v6e/v7x
        ),
    )(x2d, w1p, w2p)

    return out2d[:M, :E].reshape(B, T, E)


def _reference_f32(x, w1, w2):
    h = jnp.maximum(jnp.einsum("bte,eh->bth", x, w1), 0.0)
    return jnp.einsum("bth,he->bte", h, w2)


if __name__ == "__main__":
    key = jax.random.PRNGKey(0)
    k_x, k_w1, k_w2 = jax.random.split(key, 3)

    B, T, E = 2, 8, EMBED_SIZE

    x = jax.random.normal(k_x, (B, T, E), dtype=jnp.float32)
    # Deterministic init mimicking nn.Linear (uniform +-1/sqrt(fan_in)),
    # stored transposed as (in, out).
    w1 = jax.random.uniform(k_w1, (E, HIDDEN_SIZE), dtype=jnp.float32,
                            minval=-1.0 / (E ** 0.5), maxval=1.0 / (E ** 0.5))
    w2 = jax.random.uniform(k_w2, (HIDDEN_SIZE, E), dtype=jnp.float32,
                            minval=-1.0 / (HIDDEN_SIZE ** 0.5),
                            maxval=1.0 / (HIDDEN_SIZE ** 0.5))

    out = feed_forward(x, w1, w2)
    jax.block_until_ready(out)
    assert out.shape == (B, T, E)

    # f32 reference; tolerance loosened because the kernel does bf16 matmuls
    # with f32 accumulation (standard mixed precision).
    ref = _reference_f32(x, w1, w2)
    assert jnp.allclose(out, ref, atol=3e-2, rtol=3e-2), \
        float(jnp.max(jnp.abs(out - ref)))

    print("KERNEL_OK")
</pallas_src>

<mosaic_0001>
module attributes {stable_mosaic.version = 11 : i64} {
  func.func @_ffn_kernel(%arg0: i32, %arg1: memref<8x128xbf16, #tpu.memory_space<vmem>>, %arg2: memref<128x384xbf16, #tpu.memory_space<vmem>>, %arg3: memref<384x128xbf16, #tpu.memory_space<vmem>>, %arg4: memref<8x128xf32, #tpu.memory_space<vmem>>) attributes {dimension_semantics = [#tpu.dimension_semantics<parallel>], iteration_bounds = array<i64: 2>, scalar_prefetch = 0 : i64, scratch_operands = 0 : i64, tpu.core_type = #tpu.core_type<tc>, window_params = [{transform_indices = @transform_0, window_bounds = array<i64: 8, 128>}, {pipeline_mode = #tpu.pipeline_mode<synchronous>, transform_indices = @transform_1, window_bounds = array<i64: 128, 384>}, {pipeline_mode = #tpu.pipeline_mode<synchronous>, transform_indices = @transform_2, window_bounds = array<i64: 384, 128>}, {transform_indices = @transform_3, window_bounds = array<i64: 8, 128>}]} {
    %c0 = arith.constant 0 : index
    %c0_0 = arith.constant 0 : index
    %0 = vector.load %arg1[%c0, %c0_0] : memref<8x128xbf16, #tpu.memory_space<vmem>>, vector<8x128xbf16>
    %c0_1 = arith.constant 0 : index
    %c0_2 = arith.constant 0 : index
    %1 = vector.load %arg2[%c0_1, %c0_2] : memref<128x384xbf16, #tpu.memory_space<vmem>>, vector<128x384xbf16>
    %cst = arith.constant dense<0.000000e+00> : vector<8x384xf32>
    %2 = tpu.matmul %0, %1, %cst {dimension_numbers = #tpu.dot_dimension_numbers<[1], [0], [0], [1], [0, 0, 1, 1], [], []>} : vector<8x128xbf16>, vector<128x384xbf16>, vector<8x384xf32> -> vector<8x384xf32>
    %cst_3 = arith.constant 0.000000e+00 : f32
    %3 = vector.broadcast %cst_3 : f32 to vector<8x384xf32>
    %4 = arith.maximumf %2, %3 : vector<8x384xf32>
    %5 = arith.truncf %4 : vector<8x384xf32> to vector<8x384xbf16>
    %c0_4 = arith.constant 0 : index
    %c0_5 = arith.constant 0 : index
    %6 = vector.load %arg3[%c0_4, %c0_5] : memref<384x128xbf16, #tpu.memory_space<vmem>>, vector<384x128xbf16>
    %cst_6 = arith.constant dense<0.000000e+00> : vector<8x128xf32>
    %7 = tpu.matmul %5, %6, %cst_6 {dimension_numbers = #tpu.dot_dimension_numbers<[1], [0], [0], [1], [0, 0, 1, 1], [], []>} : vector<8x384xbf16>, vector<384x128xbf16>, vector<8x128xf32> -> vector<8x128xf32>
    %c0_7 = arith.constant 0 : index
    %c0_8 = arith.constant 0 : index
    %8 = vector.load %arg4[%c0_7, %c0_8] : memref<8x128xf32, #tpu.memory_space<vmem>>, vector<8x128xf32>
    tpu.vector_store %arg4[%c0_7, %c0_8], %7 {strides = array<i32>} : memref<8x128xf32, #tpu.memory_space<vmem>>, vector<8x128xf32>,
    return
  }
  func.func @transform_0(%arg0: i32) -> (i32, i32) {
    %c0_i32 = arith.constant 0 : i32
    %c0_i32_0 = arith.constant 0 : i32
    return %arg0, %c0_i32 : i32, i32
  }
  func.func @transform_1(%arg0: i32) -> (i32, i32) {
    %c0_i32 = arith.constant 0 : i32
    %c0_i32_0 = arith.constant 0 : i32
    %c0_i32_1 = arith.constant 0 : i32
    return %c0_i32, %c0_i32_0 : i32, i32
  }
  func.func @transform_2(%arg0: i32) -> (i32, i32) {
    %c0_i32 = arith.constant 0 : i32
    %c0_i32_0 = arith.constant 0 : i32
    %c0_i32_1 = arith.constant 0 : i32
    return %c0_i32, %c0_i32_0 : i32, i32
  }
  func.func @transform_3(%arg0: i32) -> (i32, i32) {
    %c0_i32 = arith.constant 0 : i32
    %c0_i32_0 = arith.constant 0 : i32
    return %arg0, %c0_i32 : i32, i32
  }
}

</mosaic_0001>

<llo_original>
// kernel: tpu_custom_call.1
$region0: #{tpu_custom_call.1}
  #allocation0 [shape = 'u32[]', space=smem, size = 0x4, offset = 0x4, fixed_abs, tag = 'smem constant byte address 0x4 - core index']
  #allocation1 [shape = 'u32[144,128]{1,0:T(1,128)}', space=vmem, size = 0x12000, scoped, tag = 'internal scratch']
  %s0 = inlined_call_operand.hbm [shape: bf16[16,128], index: 0, kind: input, shape index: {}]
  %s1 = inlined_call_operand.hbm [shape: bf16[128,384], index: 1, kind: input, shape index: {}]
  %s2 = inlined_call_operand.hbm [shape: bf16[384,128], index: 2, kind: input, shape index: {}]
  %s3 = inlined_call_operand.hbm [shape: f32[16,128], index: 3, kind: output, shape index: {}]
  %s4 = sld [smem:[#allocation0]]
  $region57: #{tpu_custom_call.1} parent=0
    _
  %s6 = ssub.s32 1, %s4
  %s7 = scalar_select 0, %s6, %s4
  $region1: #{tpu_custom_call.1} parent=0
    #allocation2 [shape = 'u8[4096]{0}', space=vmem, size = 0x1000, scoped, tag = 'input window, operand 0']
    #allocation3 [shape = 's32[2]{0}', space=sflag, size = 0x8, scoped, tag = 'scoped memory for tpu_custom_call.1']
    #allocation4 [shape = 's32[2]{0}', space=sflag, size = 0x8, scoped, tag = 'scoped memory for tpu_custom_call.1']
    #allocation5 [shape = 'u8[98304]{0}', space=vmem, size = 0x18000, scoped, tag = 'input window, operand 1, single buffered']
    #allocation6 [shape = 's32[1]{0}', space=sflag, size = 0x4, scoped, tag = 'scoped memory for tpu_custom_call.1']
    #allocation7 [shape = 'u8[98304]{0}', space=vmem, size = 0x18000, scoped, tag = 'input window, operand 2, single buffered']
    #allocation8 [shape = 'u8[8192]{0}', space=vmem, size = 0x2000, scoped, tag = 'output window, operand 0']
    %8 = vsyncpa [#allocation3], 0
    %s9 = scalar_lea.sflag [#allocation3], 1
    %10 = vsyncpa %s9, 0
    %11 = vsyncpa [#allocation6], 0
    %12 = vsyncpa [#allocation4], 0
    %s13 = scalar_lea.sflag [#allocation4], 1
    %14 = vsyncpa %s13, 0
    loop: start=0, step=1, limit=4
    $region2: #{tpu_custom_call.1} parent=1 // loop_pre_header
      _
    $region3: #{tpu_custom_call.1} parent=1 // loop_header
      %s16 = sphi 0, %s20
      %p17 = scmp.ge.s32.totalorder %s16, 4
      %s26 = sphi 0, %s28
      %s29 = sphi 0, %s26
      %s30 = sphi 0, %s29
      %s46 = sphi 0, %s30
      %s50 = sphi 0, %s50
      %s52 = sphi 0, %s50
      %s53 = sphi 0, %s52
      %s67 = sphi 0, %s53
      %s71 = sphi 0, %s71
      %s73 = sphi 0, %s71
      %s74 = sphi 0, %s73
      %s88 = sphi 0, %s74
      %s94 = sphi 0, %s96
      %s97 = sphi 0, %s94
      %s98 = sphi 0, %s97
      %s114 = sphi 0, %s98
    $region4: #{tpu_custom_call.1} parent=1 // loop_header_branch
      %19 = sbr.rel (%p17) target = $region8
    $region5: #{tpu_custom_call.1} parent=1 // loop_body
      %s21 = ssub.s32 %s16, 1
      %s22 = ssub.s32 %s16, 2
      %s23 = sadd.s32 %s16, 1
      %s24 = ssub.s32 %s16, %s23
      %p25 = scmp.eq.s32.totalorder %s24, 0
      %s27 = sadd.s32 %s26, 1
      %s28 = scalar_select %p25, %s26, %s27
      %p31 = pneg %p25
      %p32 = scmp.eq.s32.totalorder %s16, 1
      %p33 = por %p31, %p32
      %p34 = scmp.ne.s32.totalorder %s26, %s29
      %p35 = scmp.eq.s32.totalorder %s16, 0
      %p36 = por %p34, %p35
      %p37 = scmp.ne.s32.totalorder %s26, %s29
      %p38 = scmp.eq.s32.totalorder %s21, 1
      %p39 = por %p37, %p38
      %p40 = scmp.ne.s32.totalorder %s29, %s30
      %p41 = scmp.eq.s32.totalorder %s21, 0
      %p42 = por %p40, %p41
      %p43 = scmp.ne.s32.totalorder %s29, %s30
      %p44 = scmp.eq.s32.totalorder %s22, 1
      %p45 = por %p43, %p44
      %p47 = scmp.ne.s32.totalorder %s30, %s46
      %p48 = scmp.eq.s32.totalorder %s22, 0
      %p49 = por %p47, %p48
      %s51 = sadd.s32 %s50, 1
      %p54 = scmp.eq.s32.totalorder %s16, 1
      %p55 = scmp.ne.s32.totalorder %s50, %s52
      %p56 = scmp.eq.s32.totalorder %s16, 0
      %p57 = por %p55, %p56
      %p58 = scmp.ne.s32.totalorder %s50, %s52
      %p59 = scmp.eq.s32.totalorder %s21, 1
      %p60 = por %p58, %p59
      %p61 = scmp.ne.s32.totalorder %s52, %s53
      %p62 = scmp.eq.s32.totalorder %s21, 0
      %p63 = por %p61, %p62
      %p64 = scmp.ne.s32.totalorder %s52, %s53
      %p65 = scmp.eq.s32.totalorder %s22, 1
      %p66 = por %p64, %p65
      %p68 = scmp.ne.s32.totalorder %s53, %s67
      %p69 = scmp.eq.s32.totalorder %s22, 0
      %p70 = por %p68, %p69
      %s72 = sadd.s32 %s71, 1
      %p75 = scmp.eq.s32.totalorder %s16, 1
      %p76 = scmp.ne.s32.totalorder %s71, %s73
      %p77 = scmp.eq.s32.totalorder %s16, 0
      %p78 = por %p76, %p77
      %p79 = scmp.ne.s32.totalorder %s71, %s73
      %p80 = scmp.eq.s32.totalorder %s21, 1
      %p81 = por %p79, %p80
      %p82 = scmp.ne.s32.totalorder %s73, %s74
      %p83 = scmp.eq.s32.totalorder %s21, 0
      %p84 = por %p82, %p83
      %p85 = scmp.ne.s32.totalorder %s73, %s74
      %p86 = scmp.eq.s32.totalorder %s22, 1
      %p87 = por %p85, %p86
      %p89 = scmp.ne.s32.totalorder %s74, %s88
      %p90 = scmp.eq.s32.totalorder %s22, 0
      %p91 = por %p89, %p90
      %s92 = ssub.s32 %s16, %s23
      %p93 = scmp.eq.s32.totalorder %s92, 0
      %s95 = sadd.s32 %s94, 1
      %s96 = scalar_select %p93, %s94, %s95
      %p99 = pneg %p93
      %p100 = scmp.eq.s32.totalorder %s16, 1
      %p101 = por %p99, %p100
      %p102 = scmp.ne.s32.totalorder %s94, %s97
      %p103 = scmp.eq.s32.totalorder %s16, 0
      %p104 = por %p102, %p103
      %p105 = scmp.ne.s32.totalorder %s94, %s97
      %p106 = scmp.eq.s32.totalorder %s21, 1
      %p107 = por %p105, %p106
      %p108 = scmp.ne.s32.totalorder %s97, %s98
      %p109 = scmp.eq.s32.totalorder %s21, 0
      %p110 = por %p108, %p109
      %p111 = scmp.ne.s32.totalorder %s97, %s98
      %p112 = scmp.eq.s32.totalorder %s22, 1
      %p113 = por %p111, %p112
      %p115 = scmp.ne.s32.totalorder %s98, %s114
      %p116 = scmp.eq.s32.totalorder %s22, 0
      %p117 = por %p115, %p116
      %p118 = scmp.le.s32.totalorder 1, %s16
      %p119 = scmp.lt.s32.totalorder %s16, 3
      %p120 = pnand %p118, %p119
      %p121 = pneg %p120
      // Predicated region
      $region9: #{tpu_custom_call.1} parent=5 // pred_check
        _
      $region10: #{tpu_custom_call.1} parent=5 // pred_check_branch
        %123 = sbr.rel (%p120) target = $region12
      $region11: #{tpu_custom_call.1} parent=5 // pred_region
        %s124 = ssub.s32 %s16, 1
        // Predicated region
        $region13: #{tpu_custom_call.1} parent=11 // pred_check
          %p125 = pneg %p63
        $region14: #{tpu_custom_call.1} parent=11 // pred_check_branch
          %127 = sbr.rel (%p125) target = $region16
        $region15: #{tpu_custom_call.1} parent=11 // pred_region
          %s129 = ssub.s32 3072, 3072
          %130 = vsyncadd [#allocation6], %s129
          %s131 = sshll.u32 [#allocation5], 4
          %s132 = int_to_ptr.vmem [resolvable:$true] %s131
          %137 = dma.hbm_to_vmem [thread:$0]  %s1, 3072, %s132, [#allocation6], 192, 192, 12
        $region16: #{tpu_custom_call.1} parent=11 // pred_fallthru
          _
        // Predicated region
        $region17: #{tpu_custom_call.1} parent=11 // pred_check
          %p138 = pneg %p84
        $region18: #{tpu_custom_call.1} parent=11 // pred_check_branch
          %140 = sbr.rel (%p138) target = $region20
        $region19: #{tpu_custom_call.1} parent=11 // pred_region
          %s142 = ssub.s32 3072, 3072
          %143 = vsyncadd [#allocation6], %s142
          %s144 = sshll.u32 [#allocation7], 4
          %s145 = int_to_ptr.vmem [resolvable:$true] %s144
          %150 = dma.hbm_to_vmem [thread:$0]  %s2, 3072, %s145, [#allocation6], 64, 64, 4
        $region20: #{tpu_custom_call.1} parent=11 // pred_fallthru
          _
      $region12: #{tpu_custom_call.1} parent=5 // pred_fallthru
        _
      %p151 = scmp.lt.s32.totalorder %s16, 2
      // Predicated region
      $region21: #{tpu_custom_call.1} parent=5 // pred_check
        %p152 = pneg %p151
      $region22: #{tpu_custom_call.1} parent=5 // pred_check_branch
        %154 = sbr.rel (%p152) target = $region24
      $region23: #{tpu_custom_call.1} parent=5 // pred_region
        // Predicated region
        $region25: #{tpu_custom_call.1} parent=23 // pred_check
          %p155 = pneg %p36
        $region26: #{tpu_custom_call.1} parent=23 // pred_check_branch
          %157 = sbr.rel (%p155) target = $region28
        $region27: #{tpu_custom_call.1} parent=23 // pred_region
          %s158 = sand.u32 %s26, 1
          %s159 = scalar_lea.sflag [#allocation3], %s158
          %s160 = sand.u32 %s26, 1
          %s161 = smul.addr %s160, 4
          %s162 = scalar_lea.vmem [#allocation2], %s161
          %s164 = ssub.s32 64, 64
          %165 = vsyncadd %s159, %s164
          %s166 = smul.addr %s16, 64
          %s167 = scalar_lea.hbm %s0, %s166
          %s169 = sshll.u32 %s162, 4
          %s170 = int_to_ptr.vmem [resolvable:$true] %s169
          %172 = dma.hbm_to_vmem [thread:$0]  %s167, 64, %s170, %s159
        $region28: #{tpu_custom_call.1} parent=23 // pred_fallthru
          _
      $region24: #{tpu_custom_call.1} parent=5 // pred_fallthru
        _
      %p173 = scmp.le.s32.totalorder 1, %s16
      %p174 = scmp.lt.s32.totalorder %s16, 3
      %p175 = pnand %p173, %p174
      %p176 = pneg %p175
      // Predicated region
      $region29: #{tpu_custom_call.1} parent=5 // pred_check
        _
      $region30: #{tpu_custom_call.1} parent=5 // pred_check_branch
        %178 = sbr.rel (%p175) target = $region32
      $region31: #{tpu_custom_call.1} parent=5 // pred_region
        %s179 = ssub.s32 %s16, 1
        %s180 = sand.u32 %s29, 1
        %s181 = scalar_lea.sflag [#allocation3], %s180
        %s182 = sand.u32 %s29, 1
        %s183 = smul.addr %s182, 4
        %s184 = scalar_lea.vmem [#allocation2], %s183
        // Predicated region
        $region33: #{tpu_custom_call.1} parent=31 // pred_check
          %p185 = pneg %p42
        $region34: #{tpu_custom_call.1} parent=31 // pred_check_branch
          %187 = sbr.rel (%p185) target = $region36
        $region35: #{tpu_custom_call.1} parent=31 // pred_region
          %188 = dma.done %s181, 64
        $region36: #{tpu_custom_call.1} parent=31 // pred_fallthru
          _
        // Predicated region
        $region37: #{tpu_custom_call.1} parent=31 // pred_check
          %p189 = pneg %p63
        $region38: #{tpu_custom_call.1} parent=31 // pred_check_branch
          %191 = sbr.rel (%p189) target = $region40
        $region39: #{tpu_custom_call.1} parent=31 // pred_region
          %192 = dma.done [#allocation6], 3072
        $region40: #{tpu_custom_call.1} parent=31 // pred_fallthru
          _
        // Predicated region
        $region41: #{tpu_custom_call.1} parent=31 // pred_check
          %p193 = pneg %p84
        $region42: #{tpu_custom_call.1} parent=31 // pred_check_branch
          %195 = sbr.rel (%p193) target = $region44
        $region43: #{tpu_custom_call.1} parent=31 // pred_region
          %196 = dma.done [#allocation6], 3072
        $region44: #{tpu_custom_call.1} parent=31 // pred_fallthru
          _
        %s197 = sand.u32 %s29, 1
        %s198 = scalar_lea.sflag [#allocation3], %s197
        %s199 = sand.u32 %s29, 1
        %s200 = smul.addr %s199, 4
        %s201 = scalar_lea.vmem [#allocation2], %s200
        %p202 = pneg %p42
        %p203 = pneg %p39
        %p204 = pneg %p63
        %p205 = pneg %p60
        %p206 = pneg %p84
        %p207 = pneg %p81
        %p208 = pneg %p110
        %p209 = pneg %p107
        %s210 = sand.u32 %s97, 1
        %s211 = scalar_lea.sflag [#allocation4], %s210
        %s212 = sand.u32 %s97, 1
        %s213 = smul.addr %s212, 8
        %s214 = scalar_lea.vmem [#allocation8], %s213
        %v216 = vld [vmem:[%s184] sm:$0xf]
        %v217 = vld [vmem:[#allocation5] sm:$0xff]
        %v218 = vld [vmem:[#allocation5 + $0x8] sm:$0xf]
        %v219 = vld [vmem:[#allocation5 + $0xc] sm:$0xff]
        %v220 = vld [vmem:[#allocation5 + $0x14] sm:$0xf]
        %v221 = vld [vmem:[#allocation5 + $0x18] sm:$0xff]
        %v222 = vld [vmem:[#allocation5 + $0x20] sm:$0xf]
        %v223 = vld [vmem:[#allocation5 + $0x24] sm:$0xff]
        %v224 = vld [vmem:[#allocation5 + $0x2c] sm:$0xf]
        %v225 = vld [vmem:[#allocation5 + $0x30] sm:$0xff]
        %v226 = vld [vmem:[#allocation5 + $0x38] sm:$0xf]
        %v227 = vld [vmem:[#allocation5 + $0x3c] sm:$0xff]
        %v228 = vld [vmem:[#allocation5 + $0x44] sm:$0xf]
        %v229 = vld [vmem:[#allocation5 + $0x48] sm:$0xff]
        %v230 = vld [vmem:[#allocation5 + $0x50] sm:$0xf]
        %v231 = vld [vmem:[#allocation5 + $0x54] sm:$0xff]
        %v232 = vld [vmem:[#allocation5 + $0x5c] sm:$0xf]
        %v233 = vld [vmem:[#allocation5 + $0x60] sm:$0xff]
        %v234 = vld [vmem:[#allocation5 + $0x68] sm:$0xf]
        %v235 = vld [vmem:[#allocation5 + $0x6c] sm:$0xff]
        %v236 = vld [vmem:[#allocation5 + $0x74] sm:$0xf]
        %v237 = vld [vmem:[#allocation5 + $0x78] sm:$0xff]
        %v238 = vld [vmem:[#allocation5 + $0x80] sm:$0xf]
        %v239 = vld [vmem:[#allocation5 + $0x84] sm:$0xff]
        %v240 = vld [vmem:[#allocation5 + $0x8c] sm:$0xf]
        %v241 = vld [vmem:[#allocation5 + $0x90] sm:$0xff]
        %v242 = vld [vmem:[#allocation5 + $0x98] sm:$0xf]
        %v243 = vld [vmem:[#allocation5 + $0x9c] sm:$0xff]
        %v244 = vld [vmem:[#allocation5 + $0xa4] sm:$0xf]
        %v245 = vld [vmem:[#allocation5 + $0xa8] sm:$0xff]
        %v246 = vld [vmem:[#allocation5 + $0xb0] sm:$0xf]
        %v247 = vld [vmem:[#allocation5 + $0xb4] sm:$0xff]
        %v248 = vld [vmem:[#allocation5 + $0xbc] sm:$0xf]
        %v281 = vunpack.c.l.b16 %v217
        %v282 = vunpack.c.h.b16 %v217
        %v283 = vunpack.c.l.b16 %v218
        %v284 = vunpack.c.l.b16 %v219
        %v285 = vunpack.c.h.b16 %v219
        %v286 = vunpack.c.l.b16 %v220
        %v287 = vunpack.c.l.b16 %v221
        %v288 = vunpack.c.h.b16 %v221
        %v289 = vunpack.c.l.b16 %v222
        %v290 = vunpack.c.l.b16 %v223
        %v291 = vunpack.c.h.b16 %v223
        %v292 = vunpack.c.l.b16 %v224
        %v293 = vunpack.c.l.b16 %v225
        %v294 = vunpack.c.h.b16 %v225
        %v295 = vunpack.c.l.b16 %v226
        %v296 = vunpack.c.l.b16 %v227
        %v297 = vunpack.c.h.b16 %v227
        %v298 = vunpack.c.l.b16 %v228
        %v299 = vunpack.c.l.b16 %v229
        %v300 = vunpack.c.h.b16 %v229
        %v301 = vunpack.c.l.b16 %v230
        %v302 = vunpack.c.l.b16 %v231
        %v303 = vunpack.c.h.b16 %v231
        %v304 = vunpack.c.l.b16 %v232
        %v305 = vunpack.c.l.b16 %v233
        %v306 = vunpack.c.h.b16 %v233
        %v307 = vunpack.c.l.b16 %v234
        %v308 = vunpack.c.l.b16 %v235
        %v309 = vunpack.c.h.b16 %v235
        %v310 = vunpack.c.l.b16 %v236
        %v311 = vunpack.c.l.b16 %v237
        %v312 = vunpack.c.h.b16 %v237
        %v313 = vunpack.c.l.b16 %v238
        %v314 = vunpack.c.l.b16 %v239
        %v315 = vunpack.c.h.b16 %v239
        %v316 = vunpack.c.l.b16 %v240
        %v317 = vunpack.c.l.b16 %v241
        %v318 = vunpack.c.h.b16 %v241
        %v319 = vunpack.c.l.b16 %v242
        %v320 = vunpack.c.l.b16 %v243
        %v321 = vunpack.c.h.b16 %v243
        %v322 = vunpack.c.l.b16 %v244
        %v323 = vunpack.c.l.b16 %v245
        %v324 = vunpack.c.h.b16 %v245
        %v325 = vunpack.c.l.b16 %v246
        %v326 = vunpack.c.l.b16 %v247
        %v327 = vunpack.c.h.b16 %v247
        %v328 = vunpack.c.l.b16 %v248
        %v329 = vpack.c.b16 %v284, %v281
        %v330 = vpack.c.b16 %v285, %v282
        %v331 = vpack.c.b16 %v286, %v283
        %v332 = vpack.c.b16 %v290, %v287
        %v333 = vpack.c.b16 %v291, %v288
        %v334 = vpack.c.b16 %v292, %v289
        %v335 = vpack.c.b16 %v296, %v293
        %v336 = vpack.c.b16 %v297, %v294
        %v337 = vpack.c.b16 %v298, %v295
        %v338 = vpack.c.b16 %v302, %v299
        %v339 = vpack.c.b16 %v303, %v300
        %v340 = vpack.c.b16 %v304, %v301
        %v341 = vpack.c.b16 %v308, %v305
        %v342 = vpack.c.b16 %v309, %v306
        %v343 = vpack.c.b16 %v310, %v307
        %v344 = vpack.c.b16 %v314, %v311
        %v345 = vpack.c.b16 %v315, %v312
        %v346 = vpack.c.b16 %v316, %v313
        %v347 = vpack.c.b16 %v320, %v317
        %v348 = vpack.c.b16 %v321, %v318
        %v349 = vpack.c.b16 %v322, %v319
        %v350 = vpack.c.b16 %v326, %v323
        %v351 = vpack.c.b16 %v327, %v324
        %v352 = vpack.c.b16 %v328, %v325
        %377 = vmatprep.subr.bf16.mxu0 %v351
        %378 = vmatpush1.bf16.msra.mxu0 %v350
        %379 = vmatprep.subr.bf16.mxu0 %v348
        %380 = vmatpush1.bf16.msra.mxu0 %v347
        %381 = vmatprep.subr.bf16.mxu0 %v345
        %382 = vmatpush1.bf16.msra.mxu0 %v344
        %383 = vmatprep.subr.bf16.mxu0 %v342
        %384 = vmatpush1.bf16.msra.mxu0 %v341
        %385 = vmatprep.subr.bf16.mxu0 %v339
        %386 = vmatpush1.bf16.msra.mxu0 %v338
        %387 = vmatprep.subr.bf16.mxu0 %v336
        %388 = vmatpush1.bf16.msra.mxu0 %v335
        %389 = vmatprep.subr.bf16.mxu0 %v333
        %390 = vmatpush1.bf16.msra.mxu0 %v332
        %391 = vmatprep.subr.bf16.mxu0 %v330
        %392 = vmatpush1.bf16.msra.mxu0 %v329
        %393 = vmatprep.subr.bf16.mxu0 0
        %394 = vmatpush2.bf16.msra.mxu0 0
        %395 = vmatprep.subr.bf16.mxu0 0
        %396 = vmatpush2.bf16.msra.mxu0 0
        %397 = vmatprep.subr.bf16.mxu0 0
        %398 = vmatpush2.bf16.msra.mxu0 0
        %399 = vmatprep.subr.bf16.mxu0 0
        %400 = vmatpush2.bf16.msra.mxu0 0
        %401 = vmatprep.subr.bf16.mxu0 0
        %402 = vmatpush2.bf16.msra.mxu0 0
        %403 = vmatprep.subr.bf16.mxu0 0
        %404 = vmatpush2.bf16.msra.mxu0 0
        %405 = vmatprep.subr.bf16.mxu0 0
        %406 = vmatpush2.bf16.msra.mxu0 0
        %407 = vmatprep.subr.bf16.mxu0 0
        %408 = vmatpush2.bf16.msra.mxu0 0
        %409 = vmatprep.mubr.bf16.mxu0 0
        %410 = vmatmul.mubr.bf16.gmra.mxu0 %v216
        %v411 = vpop.f32.mrf.mxu0
        %v412 = vadd.f32 0.0, %v411
        %v413 = vpop.f32.mrf.mxu0
        %v414 = vadd.f32 0.0, %v413
        %v415 = vpop.f32.mrf.mxu0
        %v416 = vpop.f32.mrf.mxu0
        %417 = vdwg.mxu0
        %418 = vmatprep.subr.bf16.mxu0 0
        %419 = vmatpush1.bf16.msra.mxu0 %v352
        %420 = vmatprep.subr.bf16.mxu0 0
        %421 = vmatpush1.bf16.msra.mxu0 %v349
        %422 = vmatprep.subr.bf16.mxu0 0
        %423 = vmatpush1.bf16.msra.mxu0 %v346
        %424 = vmatprep.subr.bf16.mxu0 0
        %425 = vmatpush1.bf16.msra.mxu0 %v343
        %426 = vmatprep.subr.bf16.mxu0 0
        %427 = vmatpush1.bf16.msra.mxu0 %v340
        %428 = vmatprep.subr.bf16.mxu0 0
        %429 = vmatpush1.bf16.msra.mxu0 %v337
        %430 = vmatprep.subr.bf16.mxu0 0
        %431 = vmatpush1.bf16.msra.mxu0 %v334
        %432 = vmatprep.subr.bf16.mxu0 0
        %433 = vmatpush1.bf16.msra.mxu0 %v331
        %434 = vmatprep.subr.bf16.mxu0 0
        %435 = vmatpush2.bf16.msra.mxu0 0
        %436 = vmatprep.subr.bf16.mxu0 0
        %437 = vmatpush2.bf16.msra.mxu0 0
        %438 = vmatprep.subr.bf16.mxu0 0
        %439 = vmatpush2.bf16.msra.mxu0 0
        %440 = vmatprep.subr.bf16.mxu0 0
        %441 = vmatpush2.bf16.msra.mxu0 0
        %442 = vmatprep.subr.bf16.mxu0 0
        %443 = vmatpush2.bf16.msra.mxu0 0
        %444 = vmatprep.subr.bf16.mxu0 0
        %445 = vmatpush2.bf16.msra.mxu0 0
        %446 = vmatprep.subr.bf16.mxu0 0
        %447 = vmatpush2.bf16.msra.mxu0 0
        %448 = vmatprep.subr.bf16.mxu0 0
        %449 = vmatpush2.bf16.msra.mxu0 0
        %450 = vmatprep.mubr.bf16.mxu0 0
        %451 = vmatmul.mubr.bf16.gmra.mxu0 %v216
        %v452 = vpop.f32.mrf.mxu0
        %v453 = vadd.f32 0.0, %v452
        %v454 = vpop.f32.mrf.mxu0
        %v455 = vpop.f32.mrf.mxu0
        %v456 = vpop.f32.mrf.mxu0
        %457 = vdwg.mxu0
        %v458 = vmax.f32 %v412, 0.0
        %v459 = vmax.f32 %v414, 0.0
        %v460 = vmax.f32 %v453, 0.0
        %v461 = vpack.c.bf16 %v458, %v458
        %v462 = vpack.c.bf16 %v459, %v459
        %v463 = vpack.c.bf16 %v460, %v460
        %v464 = vld [vmem:[#allocation7] sm:$0xf]
        %v465 = vld [vmem:[#allocation7 + $0x4] sm:$0xf]
        %v466 = vld [vmem:[#allocation7 + $0x8] sm:$0xf]
        %v467 = vld [vmem:[#allocation7 + $0xc] sm:$0xf]
        %v468 = vld [vmem:[#allocation7 + $0x10] sm:$0xf]
        %v469 = vld [vmem:[#allocation7 + $0x14] sm:$0xf]
        %v470 = vld [vmem:[#allocation7 + $0x18] sm:$0xf]
        %v471 = vld [vmem:[#allocation7 + $0x1c] sm:$0xf]
        %v472 = vld [vmem:[#allocation7 + $0x20] sm:$0xf]
        %v473 = vld [vmem:[#allocation7 + $0x24] sm:$0xf]
        %v474 = vld [vmem:[#allocation7 + $0x28] sm:$0xf]
        %v475 = vld [vmem:[#allocation7 + $0x2c] sm:$0xf]
        %v476 = vld [vmem:[#allocation7 + $0x30] sm:$0xf]
        %v477 = vld [vmem:[#allocation7 + $0x34] sm:$0xf]
        %v478 = vld [vmem:[#allocation7 + $0x38] sm:$0xf]
        %v479 = vld [vmem:[#allocation7 + $0x3c] sm:$0xf]
        %v480 = vld [vmem:[#allocation7 + $0x40] sm:$0xf]
        %v481 = vld [vmem:[#allocation7 + $0x44] sm:$0xf]
        %v482 = vld [vmem:[#allocation7 + $0x48] sm:$0xf]
        %v483 = vld [vmem:[#allocation7 + $0x4c] sm:$0xf]
        %v484 = vld [vmem:[#allocation7 + $0x50] sm:$0xf]
        %v485 = vld [vmem:[#allocation7 + $0x54] sm:$0xf]
        %v486 = vld [vmem:[#allocation7 + $0x58] sm:$0xf]
        %v487 = vld [vmem:[#allocation7 + $0x5c] sm:$0xf]
        %v488 = vld [vmem:[#allocation7 + $0x60] sm:$0xf]
        %v489 = vld [vmem:[#allocation7 + $0x64] sm:$0xf]
        %v490 = vld [vmem:[#allocation7 + $0x68] sm:$0xf]
        %v491 = vld [vmem:[#allocation7 + $0x6c] sm:$0xf]
        %v492 = vld [vmem:[#allocation7 + $0x70] sm:$0xf]
        %v493 = vld [vmem:[#allocation7 + $0x74] sm:$0xf]
        %v494 = vld [vmem:[#allocation7 + $0x78] sm:$0xf]
        %v495 = vld [vmem:[#allocation7 + $0x7c] sm:$0xf]
        %v496 = vld [vmem:[#allocation7 + $0x80] sm:$0xf]
        %v497 = vld [vmem:[#allocation7 + $0x84] sm:$0xf]
        %v498 = vld [vmem:[#allocation7 + $0x88] sm:$0xf]
        %v499 = vld [vmem:[#allocation7 + $0x8c] sm:$0xf]
        %v500 = vld [vmem:[#allocation7 + $0x90] sm:$0xf]
        %v501 = vld [vmem:[#allocation7 + $0x94] sm:$0xf]
        %v502 = vld [vmem:[#allocation7 + $0x98] sm:$0xf]
        %v503 = vld [vmem:[#allocation7 + $0x9c] sm:$0xf]
        %v504 = vld [vmem:[#allocation7 + $0xa0] sm:$0xf]
        %v505 = vld [vmem:[#allocation7 + $0xa4] sm:$0xf]
        %v506 = vld [vmem:[#allocation7 + $0xa8] sm:$0xf]
        %v507 = vld [vmem:[#allocation7 + $0xac] sm:$0xf]
        %v508 = vld [vmem:[#allocation7 + $0xb0] sm:$0xf]
        %v509 = vld [vmem:[#allocation7 + $0xb4] sm:$0xf]
        %v510 = vld [vmem:[#allocation7 + $0xb8] sm:$0xf]
        %v511 = vld [vmem:[#allocation7 + $0xbc] sm:$0xf]
        %v560 = vunpack.c.l.b16 %v464
        %v561 = vunpack.c.l.b16 %v465
        %v562 = vunpack.c.l.b16 %v466
        %v563 = vunpack.c.l.b16 %v467
        %v564 = vunpack.c.l.b16 %v468
        %v565 = vunpack.c.l.b16 %v469
        %v566 = vunpack.c.l.b16 %v470
        %v567 = vunpack.c.l.b16 %v471
        %v568 = vunpack.c.l.b16 %v472
        %v569 = vunpack.c.l.b16 %v473
        %v570 = vunpack.c.l.b16 %v474
        %v571 = vunpack.c.l.b16 %v475
        %v572 = vunpack.c.l.b16 %v476
        %v573 = vunpack.c.l.b16 %v477
        %v574 = vunpack.c.l.b16 %v478
        %v575 = vunpack.c.l.b16 %v479
        %v576 = vunpack.c.l.b16 %v480
        %v577 = vunpack.c.l.b16 %v481
        %v578 = vunpack.c.l.b16 %v482
        %v579 = vunpack.c.l.b16 %v483
        %v580 = vunpack.c.l.b16 %v484
        %v581 = vunpack.c.l.b16 %v485
        %v582 = vunpack.c.l.b16 %v486
        %v583 = vunpack.c.l.b16 %v487
        %v584 = vunpack.c.l.b16 %v488
        %v585 = vunpack.c.l.b16 %v489
        %v586 = vunpack.c.l.b16 %v490
        %v587 = vunpack.c.l.b16 %v491
        %v588 = vunpack.c.l.b16 %v492
        %v589 = vunpack.c.l.b16 %v493
        %v590 = vunpack.c.l.b16 %v494
        %v591 = vunpack.c.l.b16 %v495
        %v592 = vunpack.c.l.b16 %v496
        %v593 = vunpack.c.l.b16 %v497
        %v594 = vunpack.c.l.b16 %v498
        %v595 = vunpack.c.l.b16 %v499
        %v596 = vunpack.c.l.b16 %v500
        %v597 = vunpack.c.l.b16 %v501
        %v598 = vunpack.c.l.b16 %v502
        %v599 = vunpack.c.l.b16 %v503
        %v600 = vunpack.c.l.b16 %v504
        %v601 = vunpack.c.l.b16 %v505
        %v602 = vunpack.c.l.b16 %v506
        %v603 = vunpack.c.l.b16 %v507
        %v604 = vunpack.c.l.b16 %v508
        %v605 = vunpack.c.l.b16 %v509
        %v606 = vunpack.c.l.b16 %v510
        %v607 = vunpack.c.l.b16 %v511
        %v608 = vpack.c.b16 %v561, %v560
        %v609 = vpack.c.b16 %v563, %v562
        %v610 = vpack.c.b16 %v565, %v564
        %v611 = vpack.c.b16 %v567, %v566
        %v612 = vpack.c.b16 %v569, %v568
        %v613 = vpack.c.b16 %v571, %v570
        %v614 = vpack.c.b16 %v573, %v572
        %v615 = vpack.c.b16 %v575, %v574
        %v616 = vpack.c.b16 %v577, %v576
        %v617 = vpack.c.b16 %v579, %v578
        %v618 = vpack.c.b16 %v581, %v580
        %v619 = vpack.c.b16 %v583, %v582
        %v620 = vpack.c.b16 %v585, %v584
        %v621 = vpack.c.b16 %v587, %v586
        %v622 = vpack.c.b16 %v589, %v588
        %v623 = vpack.c.b16 %v591, %v590
        %v624 = vpack.c.b16 %v593, %v592
        %v625 = vpack.c.b16 %v595, %v594
        %v626 = vpack.c.b16 %v597, %v596
        %v627 = vpack.c.b16 %v599, %v598
        %v628 = vpack.c.b16 %v601, %v600
        %v629 = vpack.c.b16 %v603, %v602
        %v630 = vpack.c.b16 %v605, %v604
        %v631 = vpack.c.b16 %v607, %v606
        %656 = vmatprep.subr.bf16.mxu0 0
        %657 = vmatpush1.bf16.msra.mxu0 %v615
        %658 = vmatprep.subr.bf16.mxu0 0
        %659 = vmatpush1.bf16.msra.mxu0 %v614
        %660 = vmatprep.subr.bf16.mxu0 0
        %661 = vmatpush1.bf16.msra.mxu0 %v613
        %662 = vmatprep.subr.bf16.mxu0 0
        %663 = vmatpush1.bf16.msra.mxu0 %v612
        %664 = vmatprep.subr.bf16.mxu0 0
        %665 = vmatpush1.bf16.msra.mxu0 %v611
        %666 = vmatprep.subr.bf16.mxu0 0
        %667 = vmatpush1.bf16.msra.mxu0 %v610
        %668 = vmatprep.subr.bf16.mxu0 0
        %669 = vmatpush1.bf16.msra.mxu0 %v609
        %670 = vmatprep.subr.bf16.mxu0 0
        %671 = vmatpush1.bf16.msra.mxu0 %v608
        %672 = vmatprep.subr.bf16.mxu0 0
        %673 = vmatpush2.bf16.msra.mxu0 %v623
        %674 = vmatprep.subr.bf16.mxu0 0
        %675 = vmatpush2.bf16.msra.mxu0 %v622
        %676 = vmatprep.subr.bf16.mxu0 0
        %677 = vmatpush2.bf16.msra.mxu0 %v621
        %678 = vmatprep.subr.bf16.mxu0 0
        %679 = vmatpush2.bf16.msra.mxu0 %v620
        %680 = vmatprep.subr.bf16.mxu0 0
        %681 = vmatpush2.bf16.msra.mxu0 %v619
        %682 = vmatprep.subr.bf16.mxu0 0
        %683 = vmatpush2.bf16.msra.mxu0 %v618
        %684 = vmatprep.subr.bf16.mxu0 0
        %685 = vmatpush2.bf16.msra.mxu0 %v617
        %686 = vmatprep.subr.bf16.mxu0 0
        %687 = vmatpush2.bf16.msra.mxu0 %v616
        %688 = vmatprep.mubr.bf16.mxu0 %v462
        %689 = vmatmul.mubr.bf16.gmra.mxu0 %v461
        %v690 = vpop.f32.mrf.mxu0
        %v691 = vadd.f32 0.0, %v690
        %v692 = vpop.f32.mrf.mxu0
        %v693 = vpop.f32.mrf.mxu0
        %v694 = vpop.f32.mrf.mxu0
        %695 = vdwg.mxu0
        %696 = vmatprep.subr.bf16.mxu0 0
        %697 = vmatpush1.bf16.msra.mxu0 %v631
        %698 = vmatprep.subr.bf16.mxu0 0
        %699 = vmatpush1.bf16.msra.mxu0 %v630
        %700 = vmatprep.subr.bf16.mxu0 0
        %701 = vmatpush1.bf16.msra.mxu0 %v629
        %702 = vmatprep.subr.bf16.mxu0 0
        %703 = vmatpush1.bf16.msra.mxu0 %v628
        %704 = vmatprep.subr.bf16.mxu0 0
        %705 = vmatpush1.bf16.msra.mxu0 %v627
        %706 = vmatprep.subr.bf16.mxu0 0
        %707 = vmatpush1.bf16.msra.mxu0 %v626
        %708 = vmatprep.subr.bf16.mxu0 0
        %709 = vmatpush1.bf16.msra.mxu0 %v625
        %710 = vmatprep.subr.bf16.mxu0 0
        %711 = vmatpush1.bf16.msra.mxu0 %v624
        %712 = vmatprep.subr.bf16.mxu0 0
        %713 = vmatpush2.bf16.msra.mxu0 0
        %714 = vmatprep.subr.bf16.mxu0 0
        %715 = vmatpush2.bf16.msra.mxu0 0
        %716 = vmatprep.subr.bf16.mxu0 0
        %717 = vmatpush2.bf16.msra.mxu0 0
        %718 = vmatprep.subr.bf16.mxu0 0
        %719 = vmatpush2.bf16.msra.mxu0 0
        %720 = vmatprep.subr.bf16.mxu0 0
        %721 = vmatpush2.bf16.msra.mxu0 0
        %722 = vmatprep.subr.bf16.mxu0 0
        %723 = vmatpush2.bf16.msra.mxu0 0
        %724 = vmatprep.subr.bf16.mxu0 0
        %725 = vmatpush2.bf16.msra.mxu0 0
        %726 = vmatprep.subr.bf16.mxu0 0
        %727 = vmatpush2.bf16.msra.mxu0 0
        %728 = vmatprep.mubr.bf16.mxu0 0
        %729 = vmatmul.mubr.bf16.gmra.mxu0 %v463
        %v730 = vpop.f32.mrf.mxu0
        %v731 = vadd.f32 %v691, %v730
        %v732 = vpop.f32.mrf.mxu0
        %v733 = vpop.f32.mrf.mxu0
        %v734 = vpop.f32.mrf.mxu0
        %735 = vdwg.mxu0
        %736 = vst [vmem:[%s214] sm:$0xff] %v731
        %s737 = sand.u32 %s97, 1
        %s738 = scalar_lea.sflag [#allocation4], %s737
        %s739 = sand.u32 %s97, 1
        %s740 = smul.addr %s739, 8
        %s741 = scalar_lea.vmem [#allocation8], %s740
        // Predicated region
        $region45: #{tpu_custom_call.1} parent=31 // pred_check
          %p742 = pneg %p107
        $region46: #{tpu_custom_call.1} parent=31 // pred_check_branch
          %744 = sbr.rel (%p742) target = $region48
        $region47: #{tpu_custom_call.1} parent=31 // pred_region
          %s746 = ssub.s32 128, 128
          %747 = vsyncadd %s738, %s746
          %s748 = smul.addr %s21, 128
          %s749 = scalar_lea.hbm %s3, %s748
          %s751 = sshll.u32 %s741, 4
          %s752 = int_to_ptr.vmem [resolvable:$true] %s751
          %754 = dma.vmem_to_hbm [thread:$0]  %s752, 128, %s749, %s738
        $region48: #{tpu_custom_call.1} parent=31 // pred_fallthru
          _
      $region32: #{tpu_custom_call.1} parent=5 // pred_fallthru
        _
      %p755 = scmp.le.s32.totalorder 2, %s16
      // Predicated region
      $region49: #{tpu_custom_call.1} parent=5 // pred_check
        %p756 = pneg %p755
      $region50: #{tpu_custom_call.1} parent=5 // pred_check_branch
        %758 = sbr.rel (%p756) target = $region52
      $region51: #{tpu_custom_call.1} parent=5 // pred_region
        %s759 = ssub.s32 %s16, 2
        // Predicated region
        $region53: #{tpu_custom_call.1} parent=51 // pred_check
          %p760 = pneg %p113
        $region54: #{tpu_custom_call.1} parent=51 // pred_check_branch
          %762 = sbr.rel (%p760) target = $region56
        $region55: #{tpu_custom_call.1} parent=51 // pred_region
          %s763 = sand.u32 %s98, 1
          %s764 = scalar_lea.sflag [#allocation4], %s763
          %s765 = sand.u32 %s98, 1
          %s766 = smul.addr %s765, 8
          %s767 = scalar_lea.vmem [#allocation8], %s766
          %768 = dma.done %s764, 128
        $region56: #{tpu_custom_call.1} parent=51 // pred_fallthru
          _
      $region52: #{tpu_custom_call.1} parent=5 // pred_fallthru
        _
    $region6: #{tpu_custom_call.1} parent=1 // loop_footer
      %s20 = sadd.s32 1, %s16
    $region7: #{tpu_custom_call.1} parent=1 // loop_footer_branch
      %15 = sbr.rel target = $region3
    $region8: #{tpu_custom_call.1} parent=1 // loop_exit
      _
    %769 = vsyncpa [#allocation3], 1
    %s770 = scalar_lea.sflag [#allocation3], 1
    %771 = vsyncpa %s770, 1
    %772 = vsyncpa [#allocation6], 1
    %773 = vsyncpa [#allocation4], 1
    %s774 = scalar_lea.sflag [#allocation4], 1
    %775 = vsyncpa %s774, 1

</llo_original>
